<compile_context>
chip_gen: v7x
topology: tpu7x:2x2x1
jax: 0.10.0
libtpu: 0.0.40
codegen_flags: <defaults>
</compile_context>

<pallas_src>
import functools

import jax
import jax.numpy as jnp
from jax.experimental import pallas as pl
from jax.experimental.pallas import tpu as pltpu

# itemsize -> sublane tile (f32:8, bf16/f16:16, int8/fp8:32)
_SUBLANE_TILE = {4: 8, 2: 16, 1: 32}


def _extract_latent_kernel(x_hbm, o_hbm, sems, *, g, out_len,
                           rows_per_step, rows_per_slab, slabs):
    """One grid step = a contiguous batch chunk.

    Issues `slabs` concurrent strided HBM->HBM DMAs (x[rows, g:, :] -> out[rows])
    and only then waits, so the HBM engines stream back-to-back instead of
    paying descriptor-issue + DMA latency per row.
    """
    step = pl.program_id(0)
    base = pl.multiple_of(step * rows_per_step, rows_per_step)

    copies = []
    for s in range(slabs):  # static Python loop: traced once, all starts up front
        row0 = base + s * rows_per_slab
        cp = pltpu.make_async_copy(
            x_hbm.at[pl.ds(row0, rows_per_slab), pl.ds(g, out_len), :],
            o_hbm.at[pl.ds(row0, rows_per_slab)],
            sems.at[s],
        )
        cp.start()
        copies.append(cp)
    for cp in copies:
        cp.wait()


def extract_latent_tokens(x, grid_size, *, min_pallas_bytes=128 * 1024):
    """Pallas equivalent of ExtractLatentTokens.forward: x[:, grid_size**2:, :]."""
    g = int(grid_size) ** 2
    B, S, D = x.shape
    if g > S:
        raise ValueError(f"grid_size**2={g} exceeds sequence length {S}")
    out_len = S - g
    if out_len == 0:
        # PyTorch x[:, g:] legally returns an empty tensor; nothing to DMA.
        return jnp.zeros((B, 0, D), dtype=x.dtype)

    itemsize = jnp.dtype(x.dtype).itemsize
    out_bytes = B * out_len * D * itemsize
    sublane = _SUBLANE_TILE.get(itemsize, 8)

    # Size gate: for tiny copies the custom-call launch + DMA setup dwarfs the
    # copy and XLA can fuse the slice into the consumer -> plain slice wins.
    # Alignment gate: a source offset that is not sublane-tile aligned (or a
    # non-lane-dense D) would hit the slow retiling-DMA path, so fall back.
    if (out_bytes < min_pallas_bytes) or (g % sublane != 0) or (D % 128 != 0):
        return x[:, g:, :]

    # Split the batch over (up to) 2 "parallel" grid steps so both v7x
    # TensorCores issue DMAs; inside each step issue a few concurrent slab
    # DMAs so >=2 copies are always in flight (depth enough for v5e/v6e HBM).
    num_steps = 2 if (B >= 2 and B % 2 == 0) else 1
    rows_per_step = B // num_steps
    slabs = next(s for s in (4, 2, 1) if rows_per_step % s == 0)
    rows_per_slab = rows_per_step // slabs

    kernel = functools.partial(
        _extract_latent_kernel, g=g, out_len=out_len,
        rows_per_step=rows_per_step, rows_per_slab=rows_per_slab, slabs=slabs)

    return pl.pallas_call(
        kernel,
        out_shape=jax.ShapeDtypeStruct((B, out_len, D), x.dtype),
        grid_spec=pltpu.PrefetchScalarGridSpec(
            num_scalar_prefetch=0,
            grid=(num_steps,),
            # Raw HBM refs on both sides: pure data movement, no VMEM round
            # trip, no BlockSpec double-buffering (also immune to v7x's 64 MiB
            # VMEM -> zero-VMEM design kept on purpose).
            in_specs=[pl.BlockSpec(memory_space=pl.ANY)],
            out_specs=pl.BlockSpec(memory_space=pl.ANY),
            scratch_shapes=[pltpu.SemaphoreType.DMA((slabs,))],
        ),
        compiler_params=pltpu.CompilerParams(
            # Batch chunks are independent -> shard across TensorCores on v7x
            # (no-op on single-TC v5e/v6e).
            dimension_semantics=("parallel",),
        ),
        # Zero-FLOP, memory-bound: let XLA's scheduler overlap this custom
        # call with neighboring compute.
        cost_estimate=pl.CostEstimate(
            flops=0,
            transcendentals=0,
            bytes_accessed=2 * out_bytes,
        ),
    )(x)


if __name__ == "__main__":
    # Case 1: medium shape -> exercises the Pallas slab-DMA path.
    grid_size = 8                      # drops the first 64 patch tokens
    B, S, D = 4, 8 ** 2 + 64, 256      # 64 patch + 64 latent tokens, lane-dense D
    x = jax.random.normal(jax.random.PRNGKey(0), (B, S, D), dtype=jnp.float32)
    out = jax.block_until_ready(extract_latent_tokens(x, grid_size))
    ref = x[:, grid_size ** 2:]
    assert out.shape == ref.shape, (out.shape, ref.shape)
    assert jnp.array_equal(out, ref), "mismatch vs reference slice (pallas path)"

    # Case 2: tiny shape -> size gate returns the fused XLA slice.
    x_small = jax.random.normal(jax.random.PRNGKey(1), (2, 32, 128), jnp.float32)
    out_s = jax.block_until_ready(extract_latent_tokens(x_small, 4))
    assert jnp.array_equal(out_s, x_small[:, 16:]), "mismatch (size-gate path)"

    # Case 3: misaligned offset (6**2 = 36 not a multiple of 8) -> fallback.
    x_mis = jax.random.normal(jax.random.PRNGKey(2), (2, 48, 128), jnp.float32)
    out_m = jax.block_until_ready(extract_latent_tokens(x_mis, 6))
    assert jnp.array_equal(out_m, x_mis[:, 36:]), "mismatch (alignment-gate path)"

    print("KERNEL_OK")
</pallas_src>

<mosaic_0001>
module attributes {stable_mosaic.version = 11 : i64} {
  func.func @_extract_latent_kernel(%arg0: i32, %arg1: memref<4x128x256xf32, #tpu.memory_space<any>>, %arg2: memref<4x64x256xf32, #tpu.memory_space<any>>, %arg3: memref<2x!tpu.dma_semaphore, #tpu.memory_space<semaphore_mem>>) attributes {dimension_semantics = [#tpu.dimension_semantics<parallel>], iteration_bounds = array<i64: 2>, scalar_prefetch = 0 : i64, scratch_operands = 1 : i64, tpu.core_type = #tpu.core_type<tc>, window_params = [{}, {}]} {
    %c2_i32 = arith.constant 2 : i32
    %0 = arith.muli %arg0, %c2_i32 : i32
    %1 = tpu.assume_multiple %0, 2 : i32
    %c0_i32 = arith.constant 0 : i32
    %2 = arith.addi %1, %c0_i32 : i32
    %c0_i32_0 = arith.constant 0 : i32
    %c64_i32 = arith.constant 64 : i32
    %c0_i32_1 = arith.constant 0 : i32
    %3 = tpu.memref_slice %arg1[%2, %c64_i32, %c0_i32_1] : memref<4x128x256xf32, #tpu.memory_space<any>> -> memref<1x64x256xf32, #tpu.memory_space<any>>
    %c0_i32_2 = arith.constant 0 : i32
    %c0_i32_3 = arith.constant 0 : i32
    %4 = tpu.memref_slice %arg2[%2, %c0_i32_2, %c0_i32_3] : memref<4x64x256xf32, #tpu.memory_space<any>> -> memref<1x64x256xf32, #tpu.memory_space<any>>
    %5 = tpu.memref_slice %arg3[%c0_i32_0] : memref<2x!tpu.dma_semaphore, #tpu.memory_space<semaphore_mem>> -> memref<1x!tpu.dma_semaphore, #tpu.memory_space<semaphore_mem>>
    %6 = tpu.memref_squeeze %5 : memref<1x!tpu.dma_semaphore, #tpu.memory_space<semaphore_mem>> -> memref<!tpu.dma_semaphore, #tpu.memory_space<semaphore_mem>>
    tpu.enqueue_dma source(%3 : memref<1x64x256xf32, #tpu.memory_space<any>>) target(%4 : memref<1x64x256xf32, #tpu.memory_space<any>>) target_semaphore(%6 : memref<!tpu.dma_semaphore, #tpu.memory_space<semaphore_mem>>)
    %c1_i32 = arith.constant 1 : i32
    %7 = arith.addi %1, %c1_i32 : i32
    %c1_i32_4 = arith.constant 1 : i32
    %c64_i32_5 = arith.constant 64 : i32
    %c0_i32_6 = arith.constant 0 : i32
    %8 = tpu.memref_slice %arg1[%7, %c64_i32_5, %c0_i32_6] : memref<4x128x256xf32, #tpu.memory_space<any>> -> memref<1x64x256xf32, #tpu.memory_space<any>>
    %c0_i32_7 = arith.constant 0 : i32
    %c0_i32_8 = arith.constant 0 : i32
    %9 = tpu.memref_slice %arg2[%7, %c0_i32_7, %c0_i32_8] : memref<4x64x256xf32, #tpu.memory_space<any>> -> memref<1x64x256xf32, #tpu.memory_space<any>>
    %10 = tpu.memref_slice %arg3[%c1_i32_4] : memref<2x!tpu.dma_semaphore, #tpu.memory_space<semaphore_mem>> -> memref<1x!tpu.dma_semaphore, #tpu.memory_space<semaphore_mem>>
    %11 = tpu.memref_squeeze %10 : memref<1x!tpu.dma_semaphore, #tpu.memory_space<semaphore_mem>> -> memref<!tpu.dma_semaphore, #tpu.memory_space<semaphore_mem>>
    tpu.enqueue_dma source(%8 : memref<1x64x256xf32, #tpu.memory_space<any>>) target(%9 : memref<1x64x256xf32, #tpu.memory_space<any>>) target_semaphore(%11 : memref<!tpu.dma_semaphore, #tpu.memory_space<semaphore_mem>>)
    %c0_i32_9 = arith.constant 0 : i32
    %c64_i32_10 = arith.constant 64 : i32
    %c0_i32_11 = arith.constant 0 : i32
    %12 = tpu.memref_slice %arg1[%2, %c64_i32_10, %c0_i32_11] : memref<4x128x256xf32, #tpu.memory_space<any>> -> memref<1x64x256xf32, #tpu.memory_space<any>>
    %c0_i32_12 = arith.constant 0 : i32
    %c0_i32_13 = arith.constant 0 : i32
    %13 = tpu.memref_slice %arg2[%2, %c0_i32_12, %c0_i32_13] : memref<4x64x256xf32, #tpu.memory_space<any>> -> memref<1x64x256xf32, #tpu.memory_space<any>>
    %14 = tpu.memref_slice %arg3[%c0_i32_9] : memref<2x!tpu.dma_semaphore, #tpu.memory_space<semaphore_mem>> -> memref<1x!tpu.dma_semaphore, #tpu.memory_space<semaphore_mem>>
    %15 = tpu.memref_squeeze %14 : memref<1x!tpu.dma_semaphore, #tpu.memory_space<semaphore_mem>> -> memref<!tpu.dma_semaphore, #tpu.memory_space<semaphore_mem>>
    tpu.wait_dma2 semaphore(%15 : memref<!tpu.dma_semaphore, #tpu.memory_space<semaphore_mem>>) src(%12 : memref<1x64x256xf32, #tpu.memory_space<any>>) dst(%13 : memref<1x64x256xf32, #tpu.memory_space<any>>)
    %c1_i32_14 = arith.constant 1 : i32
    %c64_i32_15 = arith.constant 64 : i32
    %c0_i32_16 = arith.constant 0 : i32
    %16 = tpu.memref_slice %arg1[%7, %c64_i32_15, %c0_i32_16] : memref<4x128x256xf32, #tpu.memory_space<any>> -> memref<1x64x256xf32, #tpu.memory_space<any>>
    %c0_i32_17 = arith.constant 0 : i32
    %c0_i32_18 = arith.constant 0 : i32
    %17 = tpu.memref_slice %arg2[%7, %c0_i32_17, %c0_i32_18] : memref<4x64x256xf32, #tpu.memory_space<any>> -> memref<1x64x256xf32, #tpu.memory_space<any>>
    %18 = tpu.memref_slice %arg3[%c1_i32_14] : memref<2x!tpu.dma_semaphore, #tpu.memory_space<semaphore_mem>> -> memref<1x!tpu.dma_semaphore, #tpu.memory_space<semaphore_mem>>
    %19 = tpu.memref_squeeze %18 : memref<1x!tpu.dma_semaphore, #tpu.memory_space<semaphore_mem>> -> memref<!tpu.dma_semaphore, #tpu.memory_space<semaphore_mem>>
    tpu.wait_dma2 semaphore(%19 : memref<!tpu.dma_semaphore, #tpu.memory_space<semaphore_mem>>) src(%16 : memref<1x64x256xf32, #tpu.memory_space<any>>) dst(%17 : memref<1x64x256xf32, #tpu.memory_space<any>>)
    return
  }
}

</mosaic_0001>

<llo_original>
// kernel: tpu_custom_call.1
$region0: #{tpu_custom_call.1}
  #allocation0 [shape = 'u32[]', space=smem, size = 0x4, offset = 0x4, fixed_abs, tag = 'smem constant byte address 0x4 - core index']
  #allocation1 [shape = 'u32[144,128]{1,0:T(1,128)}', space=vmem, size = 0x12000, scoped, tag = 'internal scratch']
  #allocation2 [shape = 's32[2]{0}', space=sflag, size = 0x8, scoped, tag = 'scratch operand']
  #allocation3 [shape = 's32[]', space=sflag, size = 0x4, offset = 0, fixed_abs, tag = 'sflag constant byte address 0x0 - dummy sync flag']
  #allocation4 [shape = 'u32[0]{0}', space=smem, size = 0, offset = 0, fixed_abs, tag = 'smem constant byte address 0x0 - null']
  #allocation5 [shape = 's32[]', space=sflag, size = 0x4, offset = 0, fixed_abs, tag = 'sflag constant byte address 0x0 - dummy sync flag']
  #allocation6 [shape = 'u32[0]{0}', space=smem, size = 0, offset = 0, fixed_abs, tag = 'smem constant byte address 0x0 - null']
  %s0 = inlined_call_operand.hbm [shape: f32[4,128,256], index: 0, kind: input, shape index: {}]
  %s1 = inlined_call_operand.hbm [shape: f32[4,64,256], index: 1, kind: output, shape index: {}]
  %s2 = sld [smem:[#allocation0]]
  $region9: #{tpu_custom_call.1} parent=0
    _
  %s4 = ssub.s32 1, %s2
  %s5 = scalar_select 0, %s4, %s2
  loop: start=0, step=1, limit=2
  $region2: #{tpu_custom_call.1} parent=0 // loop_pre_header
    _
  $region3: #{tpu_custom_call.1} parent=0 // loop_header
    %s7 = sphi 0, %s11
    %p8 = scmp.ge.s32.totalorder %s7, 2
  $region4: #{tpu_custom_call.1} parent=0 // loop_header_branch
    %10 = sbr.rel (%p8) target = $region8
  $region5: #{tpu_custom_call.1} parent=0 // loop_body
    %s12 = sadd.s32 %s7, 1
    %s13 = smul.u32 %s7, 2
    %s14 = smul.u32 %s13, 32
    %s15 = sadd.s32 16, %s14
    %s16 = smul.addr %s15, 128
    %s17 = scalar_lea.hbm %s0, %s16
    %s18 = smul.u32 %s13, 16
    %s19 = smul.addr %s18, 128
    %s20 = scalar_lea.hbm %s1, %s19
    %s22 = sshll.u32 1, 14
    %s23 = sxor.u32 4294967295, %s22
    %s26 = sshll.u32 3, 24
    %s27 = sxor.u32 4294967295, %s26
    %s28 = sand.u32 0, %s27
    %s30 = sor.u32 %s28, 0
    %33 = dma.general %s17, 2048, %s20, [#allocation2], [#allocation3], [#allocation4], %s30, 0
    %s34 = sadd.s32 %s13, 1
    %s35 = smul.u32 %s34, 32
    %s36 = sadd.s32 16, %s35
    %s37 = smul.addr %s36, 128
    %s38 = scalar_lea.hbm %s0, %s37
    %s39 = smul.u32 %s34, 16
    %s40 = smul.addr %s39, 128
    %s41 = scalar_lea.hbm %s1, %s40
    %s42 = scalar_lea.sflag [#allocation2], 1
    %s44 = sshll.u32 1, 14
    %s45 = sxor.u32 4294967295, %s44
    %s48 = sshll.u32 3, 24
    %s49 = sxor.u32 4294967295, %s48
    %s50 = sand.u32 0, %s49
    %s52 = sor.u32 %s50, 0
    %55 = dma.general %s38, 2048, %s41, %s42, [#allocation5], [#allocation6], %s52, 0
    %s56 = smul.u32 8, 1
    %s57 = smul.u32 %s56, 8
    %s58 = smul.u32 %s57, 2
    %s59 = sshll.u32 %s58, 4
    %60 = dma.done [#allocation2], %s59
    %s61 = sshll.u32 %s58, 4
    %62 = dma.done %s42, %s61
  $region6: #{tpu_custom_call.1} parent=0 // loop_footer
    %s11 = sadd.s32 1, %s7
  $region7: #{tpu_custom_call.1} parent=0 // loop_footer_branch
    %6 = sbr.rel target = $region3
  $region8: #{tpu_custom_call.1} parent=0 // loop_exit
    _
  %63 = vsyncmov [#allocation2]
  %s64 = vpop.sfrf %63
  %p65 = scmp.eq.s32.totalorder %s64, 0
  %p66 = pneg %p65
  %68 = shalt.err (%p66)
  %s69 = scalar_lea.sflag [#allocation2], 1
  %70 = vsyncmov %s69
  %s71 = vpop.sfrf %70
  %p72 = scmp.eq.s32.totalorder %s71, 0
  %p73 = pneg %p72
  %75 = shalt.err (%p73)

</llo_original>
